<compile_context>
chip_gen: v7x
topology: tpu7x:2x2x1
jax: 0.10.0
libtpu: 0.0.40
codegen_flags: <defaults>
</compile_context>

<pallas_src>
import functools

import jax
import jax.numpy as jnp
from jax.experimental import pallas as pl
from jax.experimental.pallas import tpu as pltpu

BN_EPS = 1e-5
TILE_B_MAX = 2048       # rows per grid step (multiple of 8)
FORCE_SPLIT_B = 512     # batches >= this get >= 2 grid steps (v7x megacore)
HIDDEN_LANES = 128      # every layer padded to 128 lanes


def _round_up(x, m):
    return ((x + m - 1) // m) * m


# ---------------------------------------------------------------------------
# Kernel: 4 uniform 128x128 matmuls (bf16 in, f32 acc) + bias + ReLU.
# Shared by both the plain and dueling architectures (only packing differs).
# ---------------------------------------------------------------------------
def _qnet_kernel(x_ref, ws_ref, b_ref, out_ref):
    # x: (TILE_B, 128) bf16, ws: (4, 128, 128) bf16, b: (8, 128) f32
    x = x_ref[...]
    h1 = jnp.maximum(
        jnp.dot(x, ws_ref[0], preferred_element_type=jnp.float32) + b_ref[0:1, :],
        0.0)
    h2 = jnp.maximum(
        jnp.dot(h1.astype(jnp.bfloat16), ws_ref[1],
                preferred_element_type=jnp.float32) + b_ref[1:2, :],
        0.0)
    h3 = jnp.maximum(
        jnp.dot(h2.astype(jnp.bfloat16), ws_ref[2],
                preferred_element_type=jnp.float32) + b_ref[2:3, :],
        0.0)
    out = jnp.dot(h3.astype(jnp.bfloat16), ws_ref[3],
                  preferred_element_type=jnp.float32) + b_ref[3:4, :]
    out_ref[...] = out.astype(out_ref.dtype)


# ---------------------------------------------------------------------------
# Parameter init (synthetic, deterministic) -- mirrors the PyTorch module.
# ---------------------------------------------------------------------------
def init_params(state_size, action_size, seed, use_dueling=False):
    key = jax.random.PRNGKey(seed)
    ks = jax.random.split(key, 16)

    def lin(kw, kb, fan_in, fan_out):
        bound = 1.0 / jnp.sqrt(jnp.float32(fan_in))
        w = jax.random.uniform(kw, (fan_in, fan_out), jnp.float32, -bound, bound)
        b = jax.random.uniform(kb, (1, fan_out), jnp.float32, -bound, bound)
        return w, b

    def bn(kg, kb, n):
        gamma = 1.0 + 0.1 * jax.random.normal(kg, (1, n), jnp.float32)
        beta = 0.1 * jax.random.normal(kb, (1, n), jnp.float32)
        mean = 0.05 * jax.random.normal(jax.random.fold_in(kg, 1), (1, n), jnp.float32)
        var = 1.0 + 0.1 * jnp.abs(
            jax.random.normal(jax.random.fold_in(kb, 1), (1, n), jnp.float32))
        return gamma, beta, mean, var

    p = {}
    p["w1"], p["b1"] = lin(ks[0], ks[1], state_size, 128)
    p["g1"], p["be1"], p["m1"], p["v1"] = bn(ks[2], ks[3], 128)
    p["w2"], p["b2"] = lin(ks[4], ks[5], 128, 64)
    p["g2"], p["be2"], p["m2"], p["v2"] = bn(ks[6], ks[7], 64)
    if use_dueling:
        p["wv1"], p["bv1"] = lin(ks[8], ks[9], 64, 32)
        p["wv2"], p["bv2"] = lin(ks[10], ks[11], 32, 1)
        p["wa1"], p["ba1"] = lin(ks[12], ks[13], 64, 32)
        p["wa2"], p["ba2"] = lin(ks[14], ks[15], 32, action_size)
    else:
        p["wq1"], p["bq1"] = lin(ks[8], ks[9], 64, 32)
        p["wq2"], p["bq2"] = lin(ks[10], ks[11], 32, action_size)
    return p


# ---------------------------------------------------------------------------
# Parameter prep: fold eval-mode BN into linears, pad everything to 128 lanes,
# pack all weights into ONE (4,128,128) bf16 slab, all biases into (8,128) f32.
# ---------------------------------------------------------------------------
def pack_params(params, action_size, use_dueling=False):
    state_size = params["w1"].shape[0]
    assert action_size + 1 <= HIDDEN_LANES
    assert state_size <= HIDDEN_LANES, "state_size > 128 needs a K-tiled layer 1"

    # Layer 1 (state_size -> 128) with BN1 folded; rows zero-padded to 128.
    s1 = params["g1"] / jnp.sqrt(params["v1"] + BN_EPS)             # (1,128)
    w1 = params["w1"] * s1                                           # (S,128)
    b1 = (params["b1"] - params["m1"]) * s1 + params["be1"]          # (1,128)
    w1p = jnp.zeros((128, 128), jnp.float32).at[:state_size, :].set(w1)

    # Layer 2 (128 -> 64) with BN2 folded; columns zero-padded to 128.
    s2 = params["g2"] / jnp.sqrt(params["v2"] + BN_EPS)              # (1,64)
    w2 = params["w2"] * s2                                           # (128,64)
    b2 = (params["b2"] - params["m2"]) * s2 + params["be2"]          # (1,64)
    w2p = jnp.zeros((128, 128), jnp.float32).at[:, :64].set(w2)
    b2p = jnp.zeros((128,), jnp.float32).at[:64].set(b2[0])

    wh1 = jnp.zeros((128, 128), jnp.float32)
    wh2 = jnp.zeros((128, 128), jnp.float32)
    bh1 = jnp.zeros((128,), jnp.float32)
    bh2 = jnp.zeros((128,), jnp.float32)
    if use_dueling:
        # Merged head-1: lanes 0:32 = value hidden, 32:64 = advantage hidden.
        wh1 = wh1.at[:64, :32].set(params["wv1"]).at[:64, 32:64].set(params["wa1"])
        bh1 = bh1.at[:32].set(params["bv1"][0]).at[32:64].set(params["ba1"][0])
        # Block-diagonal head-2: lane 0 = V, lanes 1..A = advantages.
        wh2 = wh2.at[:32, 0:1].set(params["wv2"])
        wh2 = wh2.at[32:64, 1:1 + action_size].set(params["wa2"])
        bh2 = bh2.at[0:1].set(params["bv2"][0])
        bh2 = bh2.at[1:1 + action_size].set(params["ba2"][0])
    else:
        wh1 = wh1.at[:64, :32].set(params["wq1"])
        bh1 = bh1.at[:32].set(params["bq1"][0])
        wh2 = wh2.at[:32, :action_size].set(params["wq2"])
        bh2 = bh2.at[:action_size].set(params["bq2"][0])

    wslab = jnp.stack([w1p, w2p, wh1, wh2]).astype(jnp.bfloat16)     # (4,128,128)
    bslab = (jnp.zeros((8, 128), jnp.float32)
             .at[0].set(b1[0]).at[1].set(b2p).at[2].set(bh1).at[3].set(bh2))
    return {"wslab": wslab, "bslab": bslab}


# ---------------------------------------------------------------------------
# Forward wrapper: balanced batch tiles, megacore-friendly grid, lane-dense IO.
# ---------------------------------------------------------------------------
@functools.partial(jax.jit, static_argnames=("action_size", "use_dueling"))
def qnetwork_forward(state, packed, action_size, use_dueling=False):
    B, S = state.shape

    # Balanced batch tiling: pick num_tiles first, then balance the tile size.
    b8 = _round_up(B, 8)
    num_tiles = pl.cdiv(b8, TILE_B_MAX)
    if b8 >= FORCE_SPLIT_B and num_tiles < 2:
        num_tiles = 2                      # >=2 grid steps -> both v7x TCs used
    tile = _round_up(pl.cdiv(b8, num_tiles), 8)
    B_pad = num_tiles * tile

    # Pad batch rows and feature lanes (w1 rows were padded to match), cast bf16.
    state_p = jnp.zeros((B_pad, HIDDEN_LANES), jnp.bfloat16)
    state_p = state_p.at[:B, :S].set(state.astype(jnp.bfloat16))

    flops = 2 * B_pad * HIDDEN_LANES * HIDDEN_LANES * 4
    bytes_accessed = (state_p.size * 2 + packed["wslab"].size * 2
                      + packed["bslab"].size * 4 + B_pad * HIDDEN_LANES * 4)

    out = pl.pallas_call(
        _qnet_kernel,
        out_shape=jax.ShapeDtypeStruct((B_pad, HIDDEN_LANES), jnp.float32),
        grid_spec=pltpu.PrefetchScalarGridSpec(
            num_scalar_prefetch=0,
            grid=(num_tiles,),
            in_specs=[
                pl.BlockSpec((tile, HIDDEN_LANES), lambda i: (i, 0)),       # state
                pl.BlockSpec((4, HIDDEN_LANES, HIDDEN_LANES),
                             lambda i: (0, 0, 0)),                          # weights
                pl.BlockSpec((8, HIDDEN_LANES), lambda i: (0, 0)),          # biases
            ],
            out_specs=pl.BlockSpec((tile, HIDDEN_LANES), lambda i: (i, 0)),
        ),
        compiler_params=pltpu.CompilerParams(
            dimension_semantics=("parallel",),
            vmem_limit_bytes=32 * 1024 * 1024),
        cost_estimate=pl.CostEstimate(
            flops=flops, transcendentals=0, bytes_accessed=bytes_accessed),
    )(state_p, packed["wslab"], packed["bslab"])

    if use_dueling:
        v = out[:B, 0:1]
        a = out[:B, 1:1 + action_size]
        # Batch-global advantage mean, exactly as in the original PyTorch module.
        return v + (a - jnp.mean(a))
    return out[:B, :action_size]


# ---------------------------------------------------------------------------
# Pure-JAX f32 reference (eval-mode BN, unfolded params).
# ---------------------------------------------------------------------------
def _reference_forward(state, params, use_dueling=False):
    def bn_relu(h, g, be, m, v):
        return jnp.maximum((h - m) / jnp.sqrt(v + BN_EPS) * g + be, 0.0)

    h = bn_relu(state @ params["w1"] + params["b1"],
                params["g1"], params["be1"], params["m1"], params["v1"])
    h = bn_relu(h @ params["w2"] + params["b2"],
                params["g2"], params["be2"], params["m2"], params["v2"])
    if use_dueling:
        v = jnp.maximum(h @ params["wv1"] + params["bv1"], 0.0) @ params["wv2"] + params["bv2"]
        a = jnp.maximum(h @ params["wa1"] + params["ba1"], 0.0) @ params["wa2"] + params["ba2"]
        return v + (a - a.mean())
    q = jnp.maximum(h @ params["wq1"] + params["bq1"], 0.0) @ params["wq2"] + params["bq2"]
    return q


if __name__ == "__main__":
    state_size, action_size = 16, 4
    key = jax.random.PRNGKey(0)

    ok = True
    for use_dueling in (False, True):
        params = init_params(state_size, action_size, seed=0, use_dueling=use_dueling)
        packed = pack_params(params, action_size, use_dueling=use_dueling)
        # multiple-of-8, ragged, and multi-tile (>=2 grid steps) batches
        for batch in (8, 37, 1000):
            state = jax.random.normal(jax.random.fold_in(key, batch),
                                      (batch, state_size), jnp.float32)
            out = qnetwork_forward(state, packed, action_size, use_dueling=use_dueling)
            out = jax.block_until_ready(out)
            ref = _reference_forward(state, params, use_dueling=use_dueling)
            assert out.shape == (batch, action_size)
            # bf16 MXU operands (f32 accumulation) -> loosened parity tolerance.
            ok &= bool(jnp.allclose(out, ref, atol=5e-2, rtol=5e-2))

    if ok:
        print("KERNEL_OK")
</pallas_src>

<mosaic_0001>
module attributes {stable_mosaic.version = 11 : i64} {
  func.func @_qnet_kernel(%arg0: i32, %arg1: memref<8x128xbf16, #tpu.memory_space<vmem>>, %arg2: memref<4x128x128xbf16, #tpu.memory_space<vmem>>, %arg3: memref<8x128xf32, #tpu.memory_space<vmem>>, %arg4: memref<8x128xf32, #tpu.memory_space<vmem>>) attributes {dimension_semantics = [#tpu.dimension_semantics<parallel>], iteration_bounds = array<i64: 1>, scalar_prefetch = 0 : i64, scratch_operands = 0 : i64, tpu.core_type = #tpu.core_type<tc>, window_params = [{transform_indices = @transform_0, window_bounds = array<i64: 8, 128>}, {pipeline_mode = #tpu.pipeline_mode<synchronous>, transform_indices = @transform_1, window_bounds = array<i64: 4, 128, 128>}, {pipeline_mode = #tpu.pipeline_mode<synchronous>, transform_indices = @transform_2, window_bounds = array<i64: 8, 128>}, {transform_indices = @transform_3, window_bounds = array<i64: 8, 128>}]} {
    %c0 = arith.constant 0 : index
    %c0_0 = arith.constant 0 : index
    %0 = vector.load %arg1[%c0, %c0_0] : memref<8x128xbf16, #tpu.memory_space<vmem>>, vector<8x128xbf16>
    %c0_1 = arith.constant 0 : index
    %c0_2 = arith.constant 0 : index
    %c0_3 = arith.constant 0 : index
    %1 = vector.load %arg2[%c0_1, %c0_2, %c0_3] : memref<4x128x128xbf16, #tpu.memory_space<vmem>>, vector<1x128x128xbf16>
    %2 = vector.shape_cast %1 : vector<1x128x128xbf16> to vector<128x128xbf16>
    %cst = arith.constant dense<0.000000e+00> : vector<8x128xf32>
    %3 = tpu.matmul %0, %2, %cst {dimension_numbers = #tpu.dot_dimension_numbers<[1], [0], [0], [1], [0, 0, 1, 1], [], []>} : vector<8x128xbf16>, vector<128x128xbf16>, vector<8x128xf32> -> vector<8x128xf32>
    %c0_4 = arith.constant 0 : index
    %c0_5 = arith.constant 0 : index
    %4 = vector.load %arg3[%c0_4, %c0_5] : memref<8x128xf32, #tpu.memory_space<vmem>>, vector<1x128xf32>
    %5 = vector.broadcast %4 : vector<1x128xf32> to vector<8x128xf32>
    %6 = arith.addf %3, %5 : vector<8x128xf32>
    %cst_6 = arith.constant 0.000000e+00 : f32
    %7 = vector.broadcast %cst_6 : f32 to vector<8x128xf32>
    %8 = arith.maximumf %6, %7 : vector<8x128xf32>
    %9 = arith.truncf %8 : vector<8x128xf32> to vector<8x128xbf16>
    %c1 = arith.constant 1 : index
    %c0_7 = arith.constant 0 : index
    %c0_8 = arith.constant 0 : index
    %10 = vector.load %arg2[%c1, %c0_7, %c0_8] : memref<4x128x128xbf16, #tpu.memory_space<vmem>>, vector<1x128x128xbf16>
    %11 = vector.shape_cast %10 : vector<1x128x128xbf16> to vector<128x128xbf16>
    %cst_9 = arith.constant dense<0.000000e+00> : vector<8x128xf32>
    %12 = tpu.matmul %9, %11, %cst_9 {dimension_numbers = #tpu.dot_dimension_numbers<[1], [0], [0], [1], [0, 0, 1, 1], [], []>} : vector<8x128xbf16>, vector<128x128xbf16>, vector<8x128xf32> -> vector<8x128xf32>
    %c1_10 = arith.constant 1 : index
    %c0_11 = arith.constant 0 : index
    %13 = vector.load %arg3[%c1_10, %c0_11] : memref<8x128xf32, #tpu.memory_space<vmem>>, vector<1x128xf32>
    %14 = vector.broadcast %13 : vector<1x128xf32> to vector<8x128xf32>
    %15 = arith.addf %12, %14 : vector<8x128xf32>
    %cst_12 = arith.constant 0.000000e+00 : f32
    %16 = vector.broadcast %cst_12 : f32 to vector<8x128xf32>
    %17 = arith.maximumf %15, %16 : vector<8x128xf32>
    %18 = arith.truncf %17 : vector<8x128xf32> to vector<8x128xbf16>
    %c2 = arith.constant 2 : index
    %c0_13 = arith.constant 0 : index
    %c0_14 = arith.constant 0 : index
    %19 = vector.load %arg2[%c2, %c0_13, %c0_14] : memref<4x128x128xbf16, #tpu.memory_space<vmem>>, vector<1x128x128xbf16>
    %20 = vector.shape_cast %19 : vector<1x128x128xbf16> to vector<128x128xbf16>
    %cst_15 = arith.constant dense<0.000000e+00> : vector<8x128xf32>
    %21 = tpu.matmul %18, %20, %cst_15 {dimension_numbers = #tpu.dot_dimension_numbers<[1], [0], [0], [1], [0, 0, 1, 1], [], []>} : vector<8x128xbf16>, vector<128x128xbf16>, vector<8x128xf32> -> vector<8x128xf32>
    %c2_16 = arith.constant 2 : index
    %c0_17 = arith.constant 0 : index
    %22 = vector.load %arg3[%c2_16, %c0_17] : memref<8x128xf32, #tpu.memory_space<vmem>>, vector<1x128xf32>
    %23 = vector.broadcast %22 : vector<1x128xf32> to vector<8x128xf32>
    %24 = arith.addf %21, %23 : vector<8x128xf32>
    %cst_18 = arith.constant 0.000000e+00 : f32
    %25 = vector.broadcast %cst_18 : f32 to vector<8x128xf32>
    %26 = arith.maximumf %24, %25 : vector<8x128xf32>
    %27 = arith.truncf %26 : vector<8x128xf32> to vector<8x128xbf16>
    %c3 = arith.constant 3 : index
    %c0_19 = arith.constant 0 : index
    %c0_20 = arith.constant 0 : index
    %28 = vector.load %arg2[%c3, %c0_19, %c0_20] : memref<4x128x128xbf16, #tpu.memory_space<vmem>>, vector<1x128x128xbf16>
    %29 = vector.shape_cast %28 : vector<1x128x128xbf16> to vector<128x128xbf16>
    %cst_21 = arith.constant dense<0.000000e+00> : vector<8x128xf32>
    %30 = tpu.matmul %27, %29, %cst_21 {dimension_numbers = #tpu.dot_dimension_numbers<[1], [0], [0], [1], [0, 0, 1, 1], [], []>} : vector<8x128xbf16>, vector<128x128xbf16>, vector<8x128xf32> -> vector<8x128xf32>
    %c3_22 = arith.constant 3 : index
    %c0_23 = arith.constant 0 : index
    %31 = vector.load %arg3[%c3_22, %c0_23] : memref<8x128xf32, #tpu.memory_space<vmem>>, vector<1x128xf32>
    %32 = vector.broadcast %31 : vector<1x128xf32> to vector<8x128xf32>
    %33 = arith.addf %30, %32 : vector<8x128xf32>
    %c0_24 = arith.constant 0 : index
    %c0_25 = arith.constant 0 : index
    %34 = vector.load %arg4[%c0_24, %c0_25] : memref<8x128xf32, #tpu.memory_space<vmem>>, vector<8x128xf32>
    tpu.vector_store %arg4[%c0_24, %c0_25], %33 {strides = array<i32>} : memref<8x128xf32, #tpu.memory_space<vmem>>, vector<8x128xf32>,
    return
  }
  func.func @transform_0(%arg0: i32) -> (i32, i32) {
    %c0_i32 = arith.constant 0 : i32
    %c0_i32_0 = arith.constant 0 : i32
    return %arg0, %c0_i32 : i32, i32
  }
  func.func @transform_1(%arg0: i32) -> (i32, i32, i32) {
    %c0_i32 = arith.constant 0 : i32
    %c0_i32_0 = arith.constant 0 : i32
    %c0_i32_1 = arith.constant 0 : i32
    %c0_i32_2 = arith.constant 0 : i32
    return %c0_i32, %c0_i32_0, %c0_i32_1 : i32, i32, i32
  }
  func.func @transform_2(%arg0: i32) -> (i32, i32) {
    %c0_i32 = arith.constant 0 : i32
    %c0_i32_0 = arith.constant 0 : i32
    %c0_i32_1 = arith.constant 0 : i32
    return %c0_i32, %c0_i32_0 : i32, i32
  }
  func.func @transform_3(%arg0: i32) -> (i32, i32) {
    %c0_i32 = arith.constant 0 : i32
    %c0_i32_0 = arith.constant 0 : i32
    return %arg0, %c0_i32 : i32, i32
  }
}

</mosaic_0001>

<llo_original>
// kernel: qnetwork_forward.1
$region0: #{qnetwork_forward.1}
  #allocation0 [shape = 'u32[]', space=smem, size = 0x4, offset = 0x4, fixed_abs, tag = 'smem constant byte address 0x4 - core index']
  #allocation1 [shape = 'u32[144,128]{1,0:T(1,128)}', space=vmem, size = 0x12000, scoped, tag = 'internal scratch']
  %s0 = inlined_call_operand.vmem [shape: bf16[8,128], index: 0, kind: input, shape index: {}]
  %s1 = inlined_call_operand.hbm [shape: bf16[4,128,128], index: 1, kind: input, shape index: {}]
  %s2 = inlined_call_operand.vmem [shape: f32[8,128], index: 2, kind: input, shape index: {}]
  %s3 = inlined_call_operand.vmem [shape: f32[8,128], index: 3, kind: output, shape index: {}]
  %s4 = sld [smem:[#allocation0]]
  $region26: #{qnetwork_forward.1} parent=0
    _
  %s6 = ssub.s32 1, %s4
  %s7 = scalar_select 0, %s6, %s4
  $region1: #{qnetwork_forward.1} parent=0
    #allocation2 [shape = 'u8[131072]{0}', space=vmem, size = 0x20000, scoped, tag = 'input window, operand 1, single buffered']
    #allocation3 [shape = 's32[1]{0}', space=sflag, size = 0x4, scoped, tag = 'scoped memory for qnetwork_forward.1']
    %8 = vsyncpa [#allocation3], 0
    // Predicated region
    $region2: #{qnetwork_forward.1} parent=1 // pred_check
      _
    $region3: #{qnetwork_forward.1} parent=1 // pred_check_branch
      %10 = sbr.rel (0) target = $region5
    $region4: #{qnetwork_forward.1} parent=1 // pred_region
      _
    $region5: #{qnetwork_forward.1} parent=1 // pred_fallthru
      _
    // Predicated region
    $region6: #{qnetwork_forward.1} parent=1 // pred_check
      _
    $region7: #{qnetwork_forward.1} parent=1 // pred_check_branch
      %12 = sbr.rel (0) target = $region9
    $region8: #{qnetwork_forward.1} parent=1 // pred_region
      %s14 = ssub.s32 4096, 4096
      %15 = vsyncadd [#allocation3], %s14
      %s16 = sshll.u32 [#allocation2], 4
      %s17 = int_to_ptr.vmem [resolvable:$true] %s16
      %22 = dma.hbm_to_vmem [thread:$0]  %s1, 4096, %s17, [#allocation3], 64, 64, 4
    $region9: #{qnetwork_forward.1} parent=1 // pred_fallthru
      _
    // Predicated region
    $region10: #{qnetwork_forward.1} parent=1 // pred_check
      _
    $region11: #{qnetwork_forward.1} parent=1 // pred_check_branch
      %24 = sbr.rel (0) target = $region13
    $region12: #{qnetwork_forward.1} parent=1 // pred_region
      _
    $region13: #{qnetwork_forward.1} parent=1 // pred_fallthru
      _
    // Predicated region
    $region14: #{qnetwork_forward.1} parent=1 // pred_check
      _
    $region15: #{qnetwork_forward.1} parent=1 // pred_check_branch
      %26 = sbr.rel (0) target = $region17
    $region16: #{qnetwork_forward.1} parent=1 // pred_region
      %27 = dma.done [#allocation3], 4096
    $region17: #{qnetwork_forward.1} parent=1 // pred_fallthru
      _
    %v29 = vld [vmem:[%s0] sm:$0xf]
    %v30 = vld [vmem:[#allocation2] sm:$0xf]
    %v31 = vld [vmem:[#allocation2 + $0x4] sm:$0xf]
    %v32 = vld [vmem:[#allocation2 + $0x8] sm:$0xf]
    %v33 = vld [vmem:[#allocation2 + $0xc] sm:$0xf]
    %v34 = vld [vmem:[#allocation2 + $0x10] sm:$0xf]
    %v35 = vld [vmem:[#allocation2 + $0x14] sm:$0xf]
    %v36 = vld [vmem:[#allocation2 + $0x18] sm:$0xf]
    %v37 = vld [vmem:[#allocation2 + $0x1c] sm:$0xf]
    %v38 = vld [vmem:[#allocation2 + $0x20] sm:$0xf]
    %v39 = vld [vmem:[#allocation2 + $0x24] sm:$0xf]
    %v40 = vld [vmem:[#allocation2 + $0x28] sm:$0xf]
    %v41 = vld [vmem:[#allocation2 + $0x2c] sm:$0xf]
    %v42 = vld [vmem:[#allocation2 + $0x30] sm:$0xf]
    %v43 = vld [vmem:[#allocation2 + $0x34] sm:$0xf]
    %v44 = vld [vmem:[#allocation2 + $0x38] sm:$0xf]
    %v45 = vld [vmem:[#allocation2 + $0x3c] sm:$0xf]
    %v46 = vld [vmem:[%s2] sm:$0x1]
    %v47 = vlaneseq
    %v48 = vshrl.u32 %v47, 7
    %v49 = vsub.s32 0, %v48
    %v50 = vrot.slane %v46, %v49
    %v67 = vunpack.c.l.b16 %v30
    %v68 = vunpack.c.l.b16 %v31
    %v69 = vunpack.c.l.b16 %v32
    %v70 = vunpack.c.l.b16 %v33
    %v71 = vunpack.c.l.b16 %v34
    %v72 = vunpack.c.l.b16 %v35
    %v73 = vunpack.c.l.b16 %v36
    %v74 = vunpack.c.l.b16 %v37
    %v75 = vunpack.c.l.b16 %v38
    %v76 = vunpack.c.l.b16 %v39
    %v77 = vunpack.c.l.b16 %v40
    %v78 = vunpack.c.l.b16 %v41
    %v79 = vunpack.c.l.b16 %v42
    %v80 = vunpack.c.l.b16 %v43
    %v81 = vunpack.c.l.b16 %v44
    %v82 = vunpack.c.l.b16 %v45
    %v83 = vpack.c.b16 %v68, %v67
    %v84 = vpack.c.b16 %v70, %v69
    %v85 = vpack.c.b16 %v72, %v71
    %v86 = vpack.c.b16 %v74, %v73
    %v87 = vpack.c.b16 %v76, %v75
    %v88 = vpack.c.b16 %v78, %v77
    %v89 = vpack.c.b16 %v80, %v79
    %v90 = vpack.c.b16 %v82, %v81
    %99 = vmatprep.subr.bf16.mxu0 0
    %100 = vmatpush1.bf16.msra.mxu0 %v83
    %101 = vmatprep.subr.bf16.mxu0 0
    %102 = vmatpush1.bf16.msra.mxu0 %v84
    %103 = vmatprep.subr.bf16.mxu0 0
    %104 = vmatpush1.bf16.msra.mxu0 %v85
    %105 = vmatprep.subr.bf16.mxu0 0
    %106 = vmatpush1.bf16.msra.mxu0 %v86
    %107 = vmatprep.subr.bf16.mxu0 0
    %108 = vmatpush1.bf16.msra.mxu0 %v87
    %109 = vmatprep.subr.bf16.mxu0 0
    %110 = vmatpush1.bf16.msra.mxu0 %v88
    %111 = vmatprep.subr.bf16.mxu0 0
    %112 = vmatpush1.bf16.msra.mxu0 %v89
    %113 = vmatprep.subr.bf16.mxu0 0
    %114 = vmatpush1.bf16.msra.mxu0 %v90
    %115 = vmatprep.subr.bf16.mxu0 0
    %116 = vmatpush1.bf16.msra.mxu0 0
    %117 = vmatprep.subr.bf16.mxu0 0
    %118 = vmatpush1.bf16.msra.mxu0 0
    %119 = vmatprep.subr.bf16.mxu0 0
    %120 = vmatpush1.bf16.msra.mxu0 0
    %121 = vmatprep.subr.bf16.mxu0 0
    %122 = vmatpush1.bf16.msra.mxu0 0
    %123 = vmatprep.subr.bf16.mxu0 0
    %124 = vmatpush1.bf16.msra.mxu0 0
    %125 = vmatprep.subr.bf16.mxu0 0
    %126 = vmatpush1.bf16.msra.mxu0 0
    %127 = vmatprep.subr.bf16.mxu0 0
    %128 = vmatpush1.bf16.msra.mxu0 0
    %129 = vmatprep.subr.bf16.mxu0 0
    %130 = vmatpush1.bf16.msra.mxu0 0
    %131 = vmatprep.mubr.bf16.mxu0 0
    %132 = vmatmul.mubr.bf16.gmra.mrb[0].mxu0 %v29
    %v133 = vpop.f32.mrb[0].mxu0
    %v134 = vadd.f32 %v50, %v133
    %v135 = vpop.f32.mrb[0].mxu0
    %v136 = vpop.f32.mrb[0].mxu0
    %v137 = vpop.f32.mrb[0].mxu0
    %138 = vdwg.mxu0
    %v139 = vmax.f32 %v134, 0.0
    %v140 = vpack.c.bf16 %v139, %v139
    %s141 = scalar_lea.vmem [#allocation2], 64
    %v142 = vld [vmem:[%s141] sm:$0xf]
    %v143 = vld [vmem:[%s141 + $0x4] sm:$0xf]
    %v144 = vld [vmem:[%s141 + $0x8] sm:$0xf]
    %v145 = vld [vmem:[%s141 + $0xc] sm:$0xf]
    %v146 = vld [vmem:[%s141 + $0x10] sm:$0xf]
    %v147 = vld [vmem:[%s141 + $0x14] sm:$0xf]
    %v148 = vld [vmem:[%s141 + $0x18] sm:$0xf]
    %v149 = vld [vmem:[%s141 + $0x1c] sm:$0xf]
    %v150 = vld [vmem:[%s141 + $0x20] sm:$0xf]
    %v151 = vld [vmem:[%s141 + $0x24] sm:$0xf]
    %v152 = vld [vmem:[%s141 + $0x28] sm:$0xf]
    %v153 = vld [vmem:[%s141 + $0x2c] sm:$0xf]
    %v154 = vld [vmem:[%s141 + $0x30] sm:$0xf]
    %v155 = vld [vmem:[%s141 + $0x34] sm:$0xf]
    %v156 = vld [vmem:[%s141 + $0x38] sm:$0xf]
    %v157 = vld [vmem:[%s141 + $0x3c] sm:$0xf]
    %v158 = vld [vmem:[%s2 + $0x1] sm:$0x1]
    %v159 = vlaneseq
    %v160 = vshrl.u32 %v159, 7
    %v161 = vsub.s32 0, %v160
    %v162 = vrot.slane %v158, %v161
    %v179 = vunpack.c.l.b16 %v142
    %v180 = vunpack.c.l.b16 %v143
    %v181 = vunpack.c.l.b16 %v144
    %v182 = vunpack.c.l.b16 %v145
    %v183 = vunpack.c.l.b16 %v146
    %v184 = vunpack.c.l.b16 %v147
    %v185 = vunpack.c.l.b16 %v148
    %v186 = vunpack.c.l.b16 %v149
    %v187 = vunpack.c.l.b16 %v150
    %v188 = vunpack.c.l.b16 %v151
    %v189 = vunpack.c.l.b16 %v152
    %v190 = vunpack.c.l.b16 %v153
    %v191 = vunpack.c.l.b16 %v154
    %v192 = vunpack.c.l.b16 %v155
    %v193 = vunpack.c.l.b16 %v156
    %v194 = vunpack.c.l.b16 %v157
    %v195 = vpack.c.b16 %v180, %v179
    %v196 = vpack.c.b16 %v182, %v181
    %v197 = vpack.c.b16 %v184, %v183
    %v198 = vpack.c.b16 %v186, %v185
    %v199 = vpack.c.b16 %v188, %v187
    %v200 = vpack.c.b16 %v190, %v189
    %v201 = vpack.c.b16 %v192, %v191
    %v202 = vpack.c.b16 %v194, %v193
    %211 = vmatprep.subr.bf16.mxu0 0
    %212 = vmatpush1.bf16.msra.mxu0 %v195
    %213 = vmatprep.subr.bf16.mxu0 0
    %214 = vmatpush1.bf16.msra.mxu0 %v196
    %215 = vmatprep.subr.bf16.mxu0 0
    %216 = vmatpush1.bf16.msra.mxu0 %v197
    %217 = vmatprep.subr.bf16.mxu0 0
    %218 = vmatpush1.bf16.msra.mxu0 %v198
    %219 = vmatprep.subr.bf16.mxu0 0
    %220 = vmatpush1.bf16.msra.mxu0 %v199
    %221 = vmatprep.subr.bf16.mxu0 0
    %222 = vmatpush1.bf16.msra.mxu0 %v200
    %223 = vmatprep.subr.bf16.mxu0 0
    %224 = vmatpush1.bf16.msra.mxu0 %v201
    %225 = vmatprep.subr.bf16.mxu0 0
    %226 = vmatpush1.bf16.msra.mxu0 %v202
    %227 = vmatprep.subr.bf16.mxu0 0
    %228 = vmatpush1.bf16.msra.mxu0 0
    %229 = vmatprep.subr.bf16.mxu0 0
    %230 = vmatpush1.bf16.msra.mxu0 0
    %231 = vmatprep.subr.bf16.mxu0 0
    %232 = vmatpush1.bf16.msra.mxu0 0
    %233 = vmatprep.subr.bf16.mxu0 0
    %234 = vmatpush1.bf16.msra.mxu0 0
    %235 = vmatprep.subr.bf16.mxu0 0
    %236 = vmatpush1.bf16.msra.mxu0 0
    %237 = vmatprep.subr.bf16.mxu0 0
    %238 = vmatpush1.bf16.msra.mxu0 0
    %239 = vmatprep.subr.bf16.mxu0 0
    %240 = vmatpush1.bf16.msra.mxu0 0
    %241 = vmatprep.subr.bf16.mxu0 0
    %242 = vmatpush1.bf16.msra.mxu0 0
    %243 = vmatprep.mubr.bf16.mxu0 0
    %244 = vmatmul.mubr.bf16.gmra.mrb[0].mxu0 %v140
    %v245 = vpop.f32.mrb[0].mxu0
    %v246 = vadd.f32 %v162, %v245
    %v247 = vpop.f32.mrb[0].mxu0
    %v248 = vpop.f32.mrb[0].mxu0
    %v249 = vpop.f32.mrb[0].mxu0
    %250 = vdwg.mxu0
    %v251 = vmax.f32 %v246, 0.0
    %v252 = vpack.c.bf16 %v251, %v251
    %s253 = scalar_lea.vmem [#allocation2], 128
    %v254 = vld [vmem:[%s253] sm:$0xf]
    %v255 = vld [vmem:[%s253 + $0x4] sm:$0xf]
    %v256 = vld [vmem:[%s253 + $0x8] sm:$0xf]
    %v257 = vld [vmem:[%s253 + $0xc] sm:$0xf]
    %v258 = vld [vmem:[%s253 + $0x10] sm:$0xf]
    %v259 = vld [vmem:[%s253 + $0x14] sm:$0xf]
    %v260 = vld [vmem:[%s253 + $0x18] sm:$0xf]
    %v261 = vld [vmem:[%s253 + $0x1c] sm:$0xf]
    %v262 = vld [vmem:[%s253 + $0x20] sm:$0xf]
    %v263 = vld [vmem:[%s253 + $0x24] sm:$0xf]
    %v264 = vld [vmem:[%s253 + $0x28] sm:$0xf]
    %v265 = vld [vmem:[%s253 + $0x2c] sm:$0xf]
    %v266 = vld [vmem:[%s253 + $0x30] sm:$0xf]
    %v267 = vld [vmem:[%s253 + $0x34] sm:$0xf]
    %v268 = vld [vmem:[%s253 + $0x38] sm:$0xf]
    %v269 = vld [vmem:[%s253 + $0x3c] sm:$0xf]
    %v270 = vld [vmem:[%s2 + $0x2] sm:$0x1]
    %v271 = vlaneseq
    %v272 = vshrl.u32 %v271, 7
    %v273 = vsub.s32 0, %v272
    %v274 = vrot.slane %v270, %v273
    %v291 = vunpack.c.l.b16 %v254
    %v292 = vunpack.c.l.b16 %v255
    %v293 = vunpack.c.l.b16 %v256
    %v294 = vunpack.c.l.b16 %v257
    %v295 = vunpack.c.l.b16 %v258
    %v296 = vunpack.c.l.b16 %v259
    %v297 = vunpack.c.l.b16 %v260
    %v298 = vunpack.c.l.b16 %v261
    %v299 = vunpack.c.l.b16 %v262
    %v300 = vunpack.c.l.b16 %v263
    %v301 = vunpack.c.l.b16 %v264
    %v302 = vunpack.c.l.b16 %v265
    %v303 = vunpack.c.l.b16 %v266
    %v304 = vunpack.c.l.b16 %v267
    %v305 = vunpack.c.l.b16 %v268
    %v306 = vunpack.c.l.b16 %v269
    %v307 = vpack.c.b16 %v292, %v291
    %v308 = vpack.c.b16 %v294, %v293
    %v309 = vpack.c.b16 %v296, %v295
    %v310 = vpack.c.b16 %v298, %v297
    %v311 = vpack.c.b16 %v300, %v299
    %v312 = vpack.c.b16 %v302, %v301
    %v313 = vpack.c.b16 %v304, %v303
    %v314 = vpack.c.b16 %v306, %v305
    %323 = vmatprep.subr.bf16.mxu0 0
    %324 = vmatpush1.bf16.msra.mxu0 %v307
    %325 = vmatprep.subr.bf16.mxu0 0
    %326 = vmatpush1.bf16.msra.mxu0 %v308
    %327 = vmatprep.subr.bf16.mxu0 0
    %328 = vmatpush1.bf16.msra.mxu0 %v309
    %329 = vmatprep.subr.bf16.mxu0 0
    %330 = vmatpush1.bf16.msra.mxu0 %v310
    %331 = vmatprep.subr.bf16.mxu0 0
    %332 = vmatpush1.bf16.msra.mxu0 %v311
    %333 = vmatprep.subr.bf16.mxu0 0
    %334 = vmatpush1.bf16.msra.mxu0 %v312
    %335 = vmatprep.subr.bf16.mxu0 0
    %336 = vmatpush1.bf16.msra.mxu0 %v313
    %337 = vmatprep.subr.bf16.mxu0 0
    %338 = vmatpush1.bf16.msra.mxu0 %v314
    %339 = vmatprep.subr.bf16.mxu0 0
    %340 = vmatpush1.bf16.msra.mxu0 0
    %341 = vmatprep.subr.bf16.mxu0 0
    %342 = vmatpush1.bf16.msra.mxu0 0
    %343 = vmatprep.subr.bf16.mxu0 0
    %344 = vmatpush1.bf16.msra.mxu0 0
    %345 = vmatprep.subr.bf16.mxu0 0
    %346 = vmatpush1.bf16.msra.mxu0 0
    %347 = vmatprep.subr.bf16.mxu0 0
    %348 = vmatpush1.bf16.msra.mxu0 0
    %349 = vmatprep.subr.bf16.mxu0 0
    %350 = vmatpush1.bf16.msra.mxu0 0
    %351 = vmatprep.subr.bf16.mxu0 0
    %352 = vmatpush1.bf16.msra.mxu0 0
    %353 = vmatprep.subr.bf16.mxu0 0
    %354 = vmatpush1.bf16.msra.mxu0 0
    %355 = vmatprep.mubr.bf16.mxu0 0
    %356 = vmatmul.mubr.bf16.gmra.mrb[0].mxu0 %v252
    %v357 = vpop.f32.mrb[0].mxu0
    %v358 = vadd.f32 %v274, %v357
    %v359 = vpop.f32.mrb[0].mxu0
    %v360 = vpop.f32.mrb[0].mxu0
    %v361 = vpop.f32.mrb[0].mxu0
    %362 = vdwg.mxu0
    %v363 = vmax.f32 %v358, 0.0
    %v364 = vpack.c.bf16 %v363, %v363
    %s365 = scalar_lea.vmem [#allocation2], 192
    %v366 = vld [vmem:[%s365] sm:$0xf]
    %v367 = vld [vmem:[%s365 + $0x4] sm:$0xf]
    %v368 = vld [vmem:[%s365 + $0x8] sm:$0xf]
    %v369 = vld [vmem:[%s365 + $0xc] sm:$0xf]
    %v370 = vld [vmem:[%s365 + $0x10] sm:$0xf]
    %v371 = vld [vmem:[%s365 + $0x14] sm:$0xf]
    %v372 = vld [vmem:[%s365 + $0x18] sm:$0xf]
    %v373 = vld [vmem:[%s365 + $0x1c] sm:$0xf]
    %v374 = vld [vmem:[%s365 + $0x20] sm:$0xf]
    %v375 = vld [vmem:[%s365 + $0x24] sm:$0xf]
    %v376 = vld [vmem:[%s365 + $0x28] sm:$0xf]
    %v377 = vld [vmem:[%s365 + $0x2c] sm:$0xf]
    %v378 = vld [vmem:[%s365 + $0x30] sm:$0xf]
    %v379 = vld [vmem:[%s365 + $0x34] sm:$0xf]
    %v380 = vld [vmem:[%s365 + $0x38] sm:$0xf]
    %v381 = vld [vmem:[%s365 + $0x3c] sm:$0xf]
    %v382 = vld [vmem:[%s2 + $0x3] sm:$0x1]
    %v383 = vlaneseq
    %v384 = vshrl.u32 %v383, 7
    %v385 = vsub.s32 0, %v384
    %v386 = vrot.slane %v382, %v385
    %v403 = vunpack.c.l.b16 %v366
    %v404 = vunpack.c.l.b16 %v367
    %v405 = vunpack.c.l.b16 %v368
    %v406 = vunpack.c.l.b16 %v369
    %v407 = vunpack.c.l.b16 %v370
    %v408 = vunpack.c.l.b16 %v371
    %v409 = vunpack.c.l.b16 %v372
    %v410 = vunpack.c.l.b16 %v373
    %v411 = vunpack.c.l.b16 %v374
    %v412 = vunpack.c.l.b16 %v375
    %v413 = vunpack.c.l.b16 %v376
    %v414 = vunpack.c.l.b16 %v377
    %v415 = vunpack.c.l.b16 %v378
    %v416 = vunpack.c.l.b16 %v379
    %v417 = vunpack.c.l.b16 %v380
    %v418 = vunpack.c.l.b16 %v381
    %v419 = vpack.c.b16 %v404, %v403
    %v420 = vpack.c.b16 %v406, %v405
    %v421 = vpack.c.b16 %v408, %v407
    %v422 = vpack.c.b16 %v410, %v409
    %v423 = vpack.c.b16 %v412, %v411
    %v424 = vpack.c.b16 %v414, %v413
    %v425 = vpack.c.b16 %v416, %v415
    %v426 = vpack.c.b16 %v418, %v417
    %435 = vmatprep.subr.bf16.mxu0 0
    %436 = vmatpush1.bf16.msra.mxu0 %v419
    %437 = vmatprep.subr.bf16.mxu0 0
    %438 = vmatpush1.bf16.msra.mxu0 %v420
    %439 = vmatprep.subr.bf16.mxu0 0
    %440 = vmatpush1.bf16.msra.mxu0 %v421
    %441 = vmatprep.subr.bf16.mxu0 0
    %442 = vmatpush1.bf16.msra.mxu0 %v422
    %443 = vmatprep.subr.bf16.mxu0 0
    %444 = vmatpush1.bf16.msra.mxu0 %v423
    %445 = vmatprep.subr.bf16.mxu0 0
    %446 = vmatpush1.bf16.msra.mxu0 %v424
    %447 = vmatprep.subr.bf16.mxu0 0
    %448 = vmatpush1.bf16.msra.mxu0 %v425
    %449 = vmatprep.subr.bf16.mxu0 0
    %450 = vmatpush1.bf16.msra.mxu0 %v426
    %451 = vmatprep.subr.bf16.mxu0 0
    %452 = vmatpush1.bf16.msra.mxu0 0
    %453 = vmatprep.subr.bf16.mxu0 0
    %454 = vmatpush1.bf16.msra.mxu0 0
    %455 = vmatprep.subr.bf16.mxu0 0
    %456 = vmatpush1.bf16.msra.mxu0 0
    %457 = vmatprep.subr.bf16.mxu0 0
    %458 = vmatpush1.bf16.msra.mxu0 0
    %459 = vmatprep.subr.bf16.mxu0 0
    %460 = vmatpush1.bf16.msra.mxu0 0
    %461 = vmatprep.subr.bf16.mxu0 0
    %462 = vmatpush1.bf16.msra.mxu0 0
    %463 = vmatprep.subr.bf16.mxu0 0
    %464 = vmatpush1.bf16.msra.mxu0 0
    %465 = vmatprep.subr.bf16.mxu0 0
    %466 = vmatpush1.bf16.msra.mxu0 0
    %467 = vmatprep.mubr.bf16.mxu0 0
    %468 = vmatmul.mubr.bf16.gmra.mrb[0].mxu0 %v364
    %v469 = vpop.f32.mrb[0].mxu0
    %v470 = vadd.f32 %v386, %v469
    %v471 = vpop.f32.mrb[0].mxu0
    %v472 = vpop.f32.mrb[0].mxu0
    %v473 = vpop.f32.mrb[0].mxu0
    %474 = vdwg.mxu0
    %475 = vst [vmem:[%s3] sm:$0xff] %v470
    // Predicated region
    $region18: #{qnetwork_forward.1} parent=1 // pred_check
      _
    $region19: #{qnetwork_forward.1} parent=1 // pred_check_branch
      %477 = sbr.rel (0) target = $region21
    $region20: #{qnetwork_forward.1} parent=1 // pred_region
      _
    $region21: #{qnetwork_forward.1} parent=1 // pred_fallthru
      _
    // Predicated region
    $region22: #{qnetwork_forward.1} parent=1 // pred_check
      _
    $region23: #{qnetwork_forward.1} parent=1 // pred_check_branch
      %479 = sbr.rel (0) target = $region25
    $region24: #{qnetwork_forward.1} parent=1 // pred_region
      _
    $region25: #{qnetwork_forward.1} parent=1 // pred_fallthru
      _
    %480 = vsyncpa [#allocation3], 1

</llo_original>
